<compile_context>
chip_gen: v6e
topology: v6e:2x2x1
jax: 0.10.0
libtpu: 0.0.40
codegen_flags: <defaults>
</compile_context>

<pallas_src>
import functools

import jax
import jax.numpy as jnp
from jax.experimental import pallas as pl
from jax.experimental.pallas import tpu as pltpu

EPS = 1e-5  # PyTorch InstanceNorm2d default eps


# ----------------------------------------------------------------------------
# Hardware / tiling helpers
# ----------------------------------------------------------------------------
def _round_up(x, m):
    return ((x + m - 1) // m) * m


def _cdiv(a, b):
    return -(-a // b)


def _sublane_pack(dtype):
    # rows per sublane-packed vreg group: 8 for 32-bit, 16 for bf16, 32 for int8
    return max(8, 32 // jnp.dtype(dtype).itemsize)


@functools.lru_cache(maxsize=None)
def _vmem_budget():
    """(pipelined-buffer budget, scoped vmem limit) derived from the chip's VMEM."""
    cap = 64 * 1024 * 1024  # conservative fallback (v7x per-TC VMEM)
    try:
        info = pltpu.get_tpu_info()
        cap = int(getattr(info, "vmem_capacity_bytes", cap)) or cap
    except Exception:
        pass
    limit = min((cap * 3) // 4, 112 * 1024 * 1024)  # leave headroom for Mosaic scratch
    budget = int(cap * 0.35)                        # target pipelined in/out footprint
    return budget, limit


@functools.lru_cache(maxsize=None)
def _num_tensorcores():
    try:
        d = jax.devices()[0]
        n = getattr(d, "num_cores", None)
        if n:
            return int(n)
        if "v7" in str(getattr(d, "device_kind", "")).lower():
            return 2
    except Exception:
        pass
    return 1


def _compiler_params(dimension_semantics):
    _, limit = _vmem_budget()
    return pltpu.CompilerParams(
        dimension_semantics=dimension_semantics, vmem_limit_bytes=int(limit)
    )


def _choose_row_tile(nc, hw, dtype, streams, f32_temps):
    """Largest sublane-aligned row tile whose double-buffered pipelined footprint plus
    in-kernel f32 temporaries fits the budget.  Returns None if even the minimum
    pack-row tile does not fit (caller must use the H*W-split path)."""
    itemsize = jnp.dtype(dtype).itemsize
    pack = _sublane_pack(dtype)
    budget, _ = _vmem_budget()
    bytes_per_row = hw * (streams * 2 * itemsize + f32_temps * 4)
    tile = budget // max(bytes_per_row, 1)
    tile = (tile // pack) * pack
    if tile < pack:
        return None
    tile = min(tile, _round_up(nc, pack))
    ncores = _num_tensorcores()
    if ncores > 1:
        # keep >= 2 grid steps per TensorCore when nc allows (imbalance smoothing on v7x)
        per_step = _round_up(_cdiv(nc, 2 * ncores), pack)
        tile = min(tile, max(per_step, pack))
    return max(tile, pack)


def _choose_hw_split(nc, hw, dtype, streams, f32_temps):
    """Row/spatial tile sizes for the H*W-split path (large spatial extents)."""
    itemsize = jnp.dtype(dtype).itemsize
    pack = _sublane_pack(dtype)
    budget, _ = _vmem_budget()
    bytes_per_elem = streams * 2 * itemsize + f32_temps * 4
    target_rows = 8 * pack  # ~64 rows for f32
    hw_tile = budget // max(target_rows * bytes_per_elem, 1)
    hw_tile = max(128, (hw_tile // 128) * 128)
    if hw_tile >= hw:
        hw_tile = hw  # degenerate: whole spatial extent in one chunk
    row_tile = budget // max(hw_tile * bytes_per_elem, 1)
    row_tile = max(pack, (row_tile // pack) * pack)
    row_tile = min(row_tile, _round_up(nc, pack))
    return row_tile, hw_tile


def _force_hw_tile(hw_tile, max_hw_tile, hw):
    if max_hw_tile is None:
        return hw_tile
    forced = max(128, (int(max_hw_tile) // 128) * 128)
    return min(hw_tile, forced, hw if hw >= 128 else hw_tile)


# ----------------------------------------------------------------------------
# Kernel: InstanceNorm2d, single HBM pass (full spatial extent resident per row tile)
# ----------------------------------------------------------------------------
def _instance_norm_kernel(x_ref, gamma_ref, beta_ref, y_ref):
    x = x_ref[...].astype(jnp.float32)
    inv_hw = 1.0 / x.shape[-1]
    s = jnp.sum(x, axis=-1, keepdims=True)
    sq = jnp.sum(x * x, axis=-1, keepdims=True)
    mean = s * inv_hw
    var = jnp.maximum(sq * inv_hw - mean * mean, 0.0)  # single-pass moments
    rstd = jax.lax.rsqrt(var + EPS)                    # EUP slot -> ~free
    scale = rstd * gamma_ref[...]
    shift = beta_ref[...] - mean * scale
    y_ref[...] = (x * scale + shift).astype(y_ref.dtype)


# ----------------------------------------------------------------------------
# Kernel: fused InstanceNorm2d + global pooling (optionally pooled-only)
# ----------------------------------------------------------------------------
def _in_pool_kernel(x_ref, gamma_ref, beta_ref, *out_refs, mode, write_y):
    if write_y:
        y_ref, p_ref = out_refs
    else:
        (p_ref,) = out_refs

    x = x_ref[...].astype(jnp.float32)
    inv_hw = 1.0 / x.shape[-1]
    s = jnp.sum(x, axis=-1, keepdims=True)
    sq = jnp.sum(x * x, axis=-1, keepdims=True)
    mean = s * inv_hw
    var = jnp.maximum(sq * inv_hw - mean * mean, 0.0)
    rstd = jax.lax.rsqrt(var + EPS)
    scale = rstd * gamma_ref[...]
    shift = beta_ref[...] - mean * scale
    y = x * scale + shift
    if write_y:
        y_ref[...] = y.astype(y_ref.dtype)

    if mode == "avg":
        pooled = jnp.sum(y, axis=-1, keepdims=True) * inv_hw
    elif mode == "max":
        pooled = jnp.max(y, axis=-1, keepdims=True)
    elif mode == "avg+max":
        pooled = jnp.sum(y, axis=-1, keepdims=True) * inv_hw + jnp.max(y, axis=-1, keepdims=True)
    else:
        raise ValueError(f"Unknown pooling mode: {mode}")
    p_ref[...] = pooled.astype(p_ref.dtype)


# ----------------------------------------------------------------------------
# Kernels: H*W-split InstanceNorm2d (two passes: moments, then apply)
# ----------------------------------------------------------------------------
def _in_moments_kernel(x_ref, mean_ref, rstd_ref, sum_sc, sq_sc, *, hw, hw_tile, mask_lanes):
    j = pl.program_id(1)

    @pl.when(j == 0)
    def _():
        sum_sc[...] = jnp.zeros_like(sum_sc)
        sq_sc[...] = jnp.zeros_like(sq_sc)

    x = x_ref[...].astype(jnp.float32)
    if mask_lanes:
        lane = jax.lax.broadcasted_iota(jnp.int32, x.shape, 1)
        x = jnp.where(lane < (hw - j * hw_tile), x, 0.0)
    sum_sc[...] += jnp.sum(x, axis=-1, keepdims=True)
    sq_sc[...] += jnp.sum(x * x, axis=-1, keepdims=True)

    @pl.when(j == pl.num_programs(1) - 1)
    def _():
        inv_hw = 1.0 / hw
        mean = sum_sc[...] * inv_hw
        var = jnp.maximum(sq_sc[...] * inv_hw - mean * mean, 0.0)
        mean_ref[...] = mean
        rstd_ref[...] = jax.lax.rsqrt(var + EPS)


def _in_apply_kernel(x_ref, mean_ref, rstd_ref, gamma_ref, beta_ref, y_ref):
    x = x_ref[...].astype(jnp.float32)
    scale = rstd_ref[...] * gamma_ref[...]
    shift = beta_ref[...] - mean_ref[...] * scale
    y_ref[...] = (x * scale + shift).astype(y_ref.dtype)


# ----------------------------------------------------------------------------
# Kernel: global pooling (handles both one-chunk and H*W-split grids)
# ----------------------------------------------------------------------------
def _glob_pool_kernel(x_ref, o_ref, sum_sc, max_sc, *, mode, hw, hw_tile, mask_lanes):
    j = pl.program_id(1)

    @pl.when(j == 0)
    def _():
        sum_sc[...] = jnp.zeros_like(sum_sc)
        max_sc[...] = jnp.full_like(max_sc, -jnp.inf)

    x = x_ref[...].astype(jnp.float32)
    if mask_lanes:
        lane = jax.lax.broadcasted_iota(jnp.int32, x.shape, 1)
        valid = lane < (hw - j * hw_tile)
        x_sum = jnp.where(valid, x, 0.0)
        x_max = jnp.where(valid, x, -jnp.inf)
    else:
        x_sum = x
        x_max = x
    if mode in ("avg", "avg+max"):
        sum_sc[...] += jnp.sum(x_sum, axis=-1, keepdims=True)
    if mode in ("max", "avg+max"):
        max_sc[...] = jnp.maximum(max_sc[...], jnp.max(x_max, axis=-1, keepdims=True))

    @pl.when(j == pl.num_programs(1) - 1)
    def _():
        if mode == "avg":
            out = sum_sc[...] * (1.0 / hw)
        elif mode == "max":
            out = max_sc[...]
        elif mode == "avg+max":
            out = sum_sc[...] * (1.0 / hw) + max_sc[...]
        else:
            raise ValueError(f"Unknown pooling mode: {mode}")
        o_ref[...] = out.astype(o_ref.dtype)


# ----------------------------------------------------------------------------
# Wrappers
# ----------------------------------------------------------------------------
def _affine_rows(weight_c, bias_c, n, nc):
    gamma = jnp.tile(weight_c.astype(jnp.float32), (n,)).reshape(nc, 1)
    beta = jnp.tile(bias_c.astype(jnp.float32), (n,)).reshape(nc, 1)
    return gamma, beta


def instance_norm_2d(x_nchw, weight_c, bias_c, *, max_hw_tile=None):
    """nn.InstanceNorm2d(C, affine=True) on an NCHW tensor."""
    n, c, h, w = x_nchw.shape
    nc, hw = n * c, h * w
    dtype = x_nchw.dtype
    itemsize = jnp.dtype(dtype).itemsize
    x2 = x_nchw.reshape(nc, hw)
    gamma, beta = _affine_rows(weight_c, bias_c, n, nc)

    row_tile = _choose_row_tile(nc, hw, dtype, streams=2, f32_temps=2)
    use_split = (row_tile is None) or (max_hw_tile is not None and max_hw_tile < hw)

    if not use_split:
        grid = _cdiv(nc, row_tile)
        out = pl.pallas_call(
            _instance_norm_kernel,
            out_shape=jax.ShapeDtypeStruct((nc, hw), dtype),
            grid=(grid,),
            in_specs=[
                pl.BlockSpec((row_tile, hw), lambda i: (i, 0)),
                pl.BlockSpec((row_tile, 1), lambda i: (i, 0)),
                pl.BlockSpec((row_tile, 1), lambda i: (i, 0)),
            ],
            out_specs=pl.BlockSpec((row_tile, hw), lambda i: (i, 0)),
            compiler_params=_compiler_params(("parallel",)),
            cost_estimate=pl.CostEstimate(
                flops=int(7 * nc * hw),
                transcendentals=int(nc),
                bytes_accessed=int(2 * nc * hw * itemsize),
            ),
        )(x2, gamma, beta)
        return out.reshape(n, c, h, w)

    # ---- H*W-split two-pass path (large spatial extents / forced for testing) ----
    row_tile, hw_tile = _choose_hw_split(nc, hw, dtype, streams=2, f32_temps=2)
    hw_tile = _force_hw_tile(hw_tile, max_hw_tile, hw)
    row_grid = _cdiv(nc, row_tile)
    hw_grid = _cdiv(hw, hw_tile)
    mask_lanes = hw_grid > 1 and (hw % hw_tile) != 0

    mean, rstd = pl.pallas_call(
        functools.partial(_in_moments_kernel, hw=hw, hw_tile=hw_tile, mask_lanes=mask_lanes),
        out_shape=(
            jax.ShapeDtypeStruct((nc, 1), jnp.float32),
            jax.ShapeDtypeStruct((nc, 1), jnp.float32),
        ),
        grid=(row_grid, hw_grid),
        in_specs=[pl.BlockSpec((row_tile, hw_tile), lambda i, j: (i, j))],
        out_specs=(
            pl.BlockSpec((row_tile, 1), lambda i, j: (i, 0)),
            pl.BlockSpec((row_tile, 1), lambda i, j: (i, 0)),
        ),
        scratch_shapes=[
            pltpu.VMEM((row_tile, 1), jnp.float32),
            pltpu.VMEM((row_tile, 1), jnp.float32),
        ],
        compiler_params=_compiler_params(("parallel", "arbitrary")),
        cost_estimate=pl.CostEstimate(
            flops=int(3 * nc * hw),
            transcendentals=int(nc),
            bytes_accessed=int(nc * hw * itemsize),
        ),
    )(x2)

    out = pl.pallas_call(
        _in_apply_kernel,
        out_shape=jax.ShapeDtypeStruct((nc, hw), dtype),
        grid=(row_grid, hw_grid),
        in_specs=[
            pl.BlockSpec((row_tile, hw_tile), lambda i, j: (i, j)),
            pl.BlockSpec((row_tile, 1), lambda i, j: (i, 0)),
            pl.BlockSpec((row_tile, 1), lambda i, j: (i, 0)),
            pl.BlockSpec((row_tile, 1), lambda i, j: (i, 0)),
            pl.BlockSpec((row_tile, 1), lambda i, j: (i, 0)),
        ],
        out_specs=pl.BlockSpec((row_tile, hw_tile), lambda i, j: (i, j)),
        compiler_params=_compiler_params(("parallel", "parallel")),
        cost_estimate=pl.CostEstimate(
            flops=int(2 * nc * hw),
            transcendentals=0,
            bytes_accessed=int(2 * nc * hw * itemsize),
        ),
    )(x2, mean, rstd, gamma, beta)
    return out.reshape(n, c, h, w)


def glob_feature_vector(x_nchw, mode="avg", reduce_dims=True, *, max_hw_tile=None):
    """ModelInterface._glob_feature_vector: adaptive_{avg,max}_pool2d(x, 1) (+ view)."""
    n, c, h, w = x_nchw.shape
    nc, hw = n * c, h * w
    dtype = x_nchw.dtype
    itemsize = jnp.dtype(dtype).itemsize
    x2 = x_nchw.reshape(nc, hw)

    row_tile = _choose_row_tile(nc, hw, dtype, streams=1, f32_temps=1)
    if (row_tile is None) or (max_hw_tile is not None and max_hw_tile < hw):
        row_tile, hw_tile = _choose_hw_split(nc, hw, dtype, streams=1, f32_temps=1)
        hw_tile = _force_hw_tile(hw_tile, max_hw_tile, hw)
    else:
        hw_tile = hw
    row_grid = _cdiv(nc, row_tile)
    hw_grid = _cdiv(hw, hw_tile)
    mask_lanes = hw_grid > 1 and (hw % hw_tile) != 0

    out = pl.pallas_call(
        functools.partial(
            _glob_pool_kernel, mode=mode, hw=hw, hw_tile=hw_tile, mask_lanes=mask_lanes
        ),
        out_shape=jax.ShapeDtypeStruct((nc, 1), dtype),
        grid=(row_grid, hw_grid),
        in_specs=[pl.BlockSpec((row_tile, hw_tile), lambda i, j: (i, j))],
        out_specs=pl.BlockSpec((row_tile, 1), lambda i, j: (i, 0)),
        scratch_shapes=[
            pltpu.VMEM((row_tile, 1), jnp.float32),
            pltpu.VMEM((row_tile, 1), jnp.float32),
        ],
        compiler_params=_compiler_params(("parallel", "arbitrary")),
        cost_estimate=pl.CostEstimate(
            flops=int(3 * nc * hw),
            transcendentals=0,
            bytes_accessed=int(nc * hw * itemsize),
        ),
    )(x2)
    if reduce_dims:
        return out.reshape(n, c)
    return out.reshape(n, c, 1, 1)


def instance_norm_2d_with_pool(
    x_nchw, weight_c, bias_c, mode="avg", reduce_dims=True, pooled_only=False
):
    """Fused InstanceNorm2d + _glob_feature_vector: single HBM read of x.
    pooled_only=True skips the normalized-tensor writeback (half the HBM traffic)."""
    n, c, h, w = x_nchw.shape
    nc, hw = n * c, h * w
    dtype = x_nchw.dtype
    itemsize = jnp.dtype(dtype).itemsize

    streams = 1 if pooled_only else 2
    row_tile = _choose_row_tile(nc, hw, dtype, streams=streams, f32_temps=2)
    if row_tile is None:
        # TODO(synk): fused single-pass path does not fit VMEM for this H*W; fall back
        # to the two-pass IN followed by the split pooling kernel.
        y = instance_norm_2d(x_nchw, weight_c, bias_c)
        p = glob_feature_vector(y, mode=mode, reduce_dims=reduce_dims)
        return p if pooled_only else (y, p)

    grid = _cdiv(nc, row_tile)
    gamma, beta = _affine_rows(weight_c, bias_c, n, nc)
    x2 = x_nchw.reshape(nc, hw)

    if pooled_only:
        out_shape = jax.ShapeDtypeStruct((nc, 1), dtype)
        out_specs = pl.BlockSpec((row_tile, 1), lambda i: (i, 0))
        bytes_moved = nc * hw * itemsize
    else:
        out_shape = (
            jax.ShapeDtypeStruct((nc, hw), dtype),
            jax.ShapeDtypeStruct((nc, 1), dtype),
        )
        out_specs = (
            pl.BlockSpec((row_tile, hw), lambda i: (i, 0)),
            pl.BlockSpec((row_tile, 1), lambda i: (i, 0)),
        )
        bytes_moved = 2 * nc * hw * itemsize

    res = pl.pallas_call(
        functools.partial(_in_pool_kernel, mode=mode, write_y=not pooled_only),
        out_shape=out_shape,
        grid=(grid,),
        in_specs=[
            pl.BlockSpec((row_tile, hw), lambda i: (i, 0)),
            pl.BlockSpec((row_tile, 1), lambda i: (i, 0)),
            pl.BlockSpec((row_tile, 1), lambda i: (i, 0)),
        ],
        out_specs=out_specs,
        compiler_params=_compiler_params(("parallel",)),
        cost_estimate=pl.CostEstimate(
            flops=int(10 * nc * hw),
            transcendentals=int(nc),
            bytes_accessed=int(bytes_moved),
        ),
    )(x2, gamma, beta)

    if pooled_only:
        return res.reshape(n, c) if reduce_dims else res.reshape(n, c, 1, 1)
    y2, p2 = res
    y = y2.reshape(n, c, h, w)
    pooled = p2.reshape(n, c) if reduce_dims else p2.reshape(n, c, 1, 1)
    return y, pooled


# ----------------------------------------------------------------------------
# MobileNetV3Base equivalent
# ----------------------------------------------------------------------------
class MobileNetV3BasePallas:
    def __init__(self, num_classes=1000, width_mult=1.0, in_channels=3,
                 input_size=(224, 224), pooling_type="avg", feature_dim=1280,
                 IN_first=False, key=None):
        self.in_size = input_size
        self.num_classes = num_classes
        self.pooling_type = pooling_type
        self.width_mult = width_mult
        self.feature_dim = feature_dim
        self.in_weight = None
        self.in_bias = None
        if IN_first:
            # deterministic synthetic affine params (PyTorch defaults would be ones/zeros)
            kw, kb = jax.random.split(key)
            self.in_weight = 1.0 + 0.1 * jax.random.normal(kw, (in_channels,), jnp.float32)
            self.in_bias = 0.1 * jax.random.normal(kb, (in_channels,), jnp.float32)

    def extract_features(self, x):
        # TODO(synk): extract_features() is abstract (NotImplementedError) in
        # MobileNetV3Base — the conv trunk lives in subclasses; identity passthrough here.
        return x

    def forward(self, x, return_featuremaps=False, get_embeddings=False, gt_labels=None):
        if self.in_weight is not None:
            x = instance_norm_2d(x, self.in_weight, self.in_bias)
        y = self.extract_features(x)
        if return_featuremaps:
            return y
        return y


# ----------------------------------------------------------------------------
# Reference (pure JAX) for correctness checks
# ----------------------------------------------------------------------------
def _ref_instance_norm(x, w, b):
    mean = jnp.mean(x, axis=(2, 3), keepdims=True)
    var = jnp.var(x, axis=(2, 3), keepdims=True)
    return (x - mean) / jnp.sqrt(var + EPS) * w[None, :, None, None] + b[None, :, None, None]


def _ref_glob(x, mode):
    avg = jnp.mean(x, axis=(2, 3))
    mx = jnp.max(x, axis=(2, 3))
    return {"avg": avg, "max": mx, "avg+max": avg + mx}[mode]


if __name__ == "__main__":
    key = jax.random.PRNGKey(0)
    kx, kp, kx2, kp2, kb2, kx3 = jax.random.split(key, 6)

    # ---- Case 1: small aligned shapes ----
    N, C, H, W = 2, 4, 16, 16
    x = jax.random.normal(kx, (N, C, H, W), jnp.float32)
    model = MobileNetV3BasePallas(in_channels=C, input_size=(H, W),
                                  pooling_type="avg", IN_first=True, key=kp)

    y = model.forward(x)
    jax.block_until_ready(y)
    y_ref = _ref_instance_norm(x, model.in_weight, model.in_bias)
    assert y.shape == (N, C, H, W)
    assert jnp.allclose(y, y_ref, atol=1e-4, rtol=1e-4)

    for mode in ("avg", "max", "avg+max"):
        g = glob_feature_vector(y, mode=mode, reduce_dims=True)
        jax.block_until_ready(g)
        assert g.shape == (N, C)
        assert jnp.allclose(g, _ref_glob(y_ref, mode), atol=1e-4, rtol=1e-4)

    for mode in ("avg", "max", "avg+max"):
        yf, gf = instance_norm_2d_with_pool(x, model.in_weight, model.in_bias, mode=mode)
        jax.block_until_ready(gf)
        assert yf.shape == (N, C, H, W) and gf.shape == (N, C)
        assert jnp.allclose(yf, y_ref, atol=1e-4, rtol=1e-4)
        assert jnp.allclose(gf, _ref_glob(y_ref, mode), atol=1e-4, rtol=1e-4)

    # pooled-only fused variant (no y writeback)
    gp = instance_norm_2d_with_pool(x, model.in_weight, model.in_bias,
                                    mode="avg+max", pooled_only=True)
    jax.block_until_ready(gp)
    assert gp.shape == (N, C)
    assert jnp.allclose(gp, _ref_glob(y_ref, "avg+max"), atol=1e-4, rtol=1e-4)

    # ---- Case 2: ragged shapes (N*C not multiple of 8, H*W not multiple of 128) ----
    N2, C2, H2, W2 = 2, 5, 7, 7
    x2 = jax.random.normal(kx2, (N2, C2, H2, W2), jnp.float32)
    w2 = 1.0 + 0.1 * jax.random.normal(kp2, (C2,), jnp.float32)
    b2 = 0.1 * jax.random.normal(kb2, (C2,), jnp.float32)
    y2 = instance_norm_2d(x2, w2, b2)
    jax.block_until_ready(y2)
    y2_ref = _ref_instance_norm(x2, w2, b2)
    assert jnp.allclose(y2, y2_ref, atol=1e-4, rtol=1e-4)
    g2 = glob_feature_vector(y2, mode="avg+max", reduce_dims=True)
    jax.block_until_ready(g2)
    assert jnp.allclose(g2, _ref_glob(y2_ref, "avg+max"), atol=1e-4, rtol=1e-4)

    # ---- Case 3: forced H*W-split path (exercises moments/apply kernels + lane mask) ----
    N3, C3, H3, W3 = 2, 4, 16, 20   # hw = 320 -> chunks 128, 128, 64 (ragged last chunk)
    x3 = jax.random.normal(kx3, (N3, C3, H3, W3), jnp.float32)
    y3 = instance_norm_2d(x3, model.in_weight, model.in_bias, max_hw_tile=128)
    jax.block_until_ready(y3)
    y3_ref = _ref_instance_norm(x3, model.in_weight, model.in_bias)
    assert jnp.allclose(y3, y3_ref, atol=1e-4, rtol=1e-4)
    g3 = glob_feature_vector(y3, mode="avg+max", reduce_dims=True, max_hw_tile=128)
    jax.block_until_ready(g3)
    assert jnp.allclose(g3, _ref_glob(y3_ref, "avg+max"), atol=1e-4, rtol=1e-4)

    print("KERNEL_OK")
</pallas_src>

<mosaic_0001>
module attributes {stable_mosaic.version = 11 : i64} {
  func.func @_instance_norm_kernel(%arg0: i32, %arg1: memref<8x256xf32, #tpu.memory_space<vmem>>, %arg2: memref<8x1xf32, #tpu.memory_space<vmem>>, %arg3: memref<8x1xf32, #tpu.memory_space<vmem>>, %arg4: memref<8x256xf32, #tpu.memory_space<vmem>>) attributes {dimension_semantics = [#tpu.dimension_semantics<parallel>], iteration_bounds = array<i64: 1>, scalar_prefetch = 0 : i64, scratch_operands = 0 : i64, tpu.core_type = #tpu.core_type<tc>, window_params = [{transform_indices = @transform_0, window_bounds = array<i64: 8, 256>}, {transform_indices = @transform_1, window_bounds = array<i64: 8, 1>}, {transform_indices = @transform_2, window_bounds = array<i64: 8, 1>}, {transform_indices = @transform_3, window_bounds = array<i64: 8, 256>}]} {
    %c0 = arith.constant 0 : index
    %c0_0 = arith.constant 0 : index
    %0 = vector.load %arg1[%c0, %c0_0] : memref<8x256xf32, #tpu.memory_space<vmem>>, vector<8x256xf32>
    %cst = arith.constant dense<0.000000e+00> : vector<8xf32>
    %1 = vector.multi_reduction <add>, %0, %cst [1] : vector<8x256xf32> to vector<8xf32>
    %2 = vector.shape_cast %1 : vector<8xf32> to vector<8x1xf32>
    %3 = arith.mulf %0, %0 : vector<8x256xf32>
    %cst_1 = arith.constant dense<0.000000e+00> : vector<8xf32>
    %4 = vector.multi_reduction <add>, %3, %cst_1 [1] : vector<8x256xf32> to vector<8xf32>
    %5 = vector.shape_cast %4 : vector<8xf32> to vector<8x1xf32>
    %cst_2 = arith.constant 3.906250e-03 : f32
    %6 = vector.broadcast %cst_2 : f32 to vector<8x1xf32>
    %7 = arith.mulf %2, %6 : vector<8x1xf32>
    %cst_3 = arith.constant 3.906250e-03 : f32
    %8 = vector.broadcast %cst_3 : f32 to vector<8x1xf32>
    %9 = arith.mulf %5, %8 : vector<8x1xf32>
    %10 = arith.mulf %7, %7 : vector<8x1xf32>
    %11 = arith.subf %9, %10 : vector<8x1xf32>
    %cst_4 = arith.constant 0.000000e+00 : f32
    %12 = vector.broadcast %cst_4 : f32 to vector<8x1xf32>
    %13 = arith.maximumf %11, %12 : vector<8x1xf32>
    %cst_5 = arith.constant 9.99999974E-6 : f32
    %14 = vector.broadcast %cst_5 : f32 to vector<8x1xf32>
    %15 = arith.addf %13, %14 : vector<8x1xf32>
    %16 = math.rsqrt %15 : vector<8x1xf32>
    %c0_6 = arith.constant 0 : index
    %c0_7 = arith.constant 0 : index
    %17 = vector.load %arg2[%c0_6, %c0_7] : memref<8x1xf32, #tpu.memory_space<vmem>>, vector<8x1xf32>
    %18 = arith.mulf %16, %17 : vector<8x1xf32>
    %c0_8 = arith.constant 0 : index
    %c0_9 = arith.constant 0 : index
    %19 = vector.load %arg3[%c0_8, %c0_9] : memref<8x1xf32, #tpu.memory_space<vmem>>, vector<8x1xf32>
    %20 = arith.mulf %7, %18 : vector<8x1xf32>
    %21 = arith.subf %19, %20 : vector<8x1xf32>
    %22 = vector.broadcast %18 : vector<8x1xf32> to vector<8x256xf32>
    %23 = arith.mulf %0, %22 : vector<8x256xf32>
    %24 = vector.broadcast %21 : vector<8x1xf32> to vector<8x256xf32>
    %25 = arith.addf %23, %24 : vector<8x256xf32>
    %c0_10 = arith.constant 0 : index
    %c0_11 = arith.constant 0 : index
    %26 = vector.load %arg4[%c0_10, %c0_11] : memref<8x256xf32, #tpu.memory_space<vmem>>, vector<8x256xf32>
    tpu.vector_store %arg4[%c0_10, %c0_11], %25 {strides = array<i32>} : memref<8x256xf32, #tpu.memory_space<vmem>>, vector<8x256xf32>,
    return
  }
  func.func @transform_0(%arg0: i32) -> (i32, i32) {
    %c0_i32 = arith.constant 0 : i32
    %c0_i32_0 = arith.constant 0 : i32
    return %arg0, %c0_i32 : i32, i32
  }
  func.func @transform_1(%arg0: i32) -> (i32, i32) {
    %c0_i32 = arith.constant 0 : i32
    %c0_i32_0 = arith.constant 0 : i32
    return %arg0, %c0_i32 : i32, i32
  }
  func.func @transform_2(%arg0: i32) -> (i32, i32) {
    %c0_i32 = arith.constant 0 : i32
    %c0_i32_0 = arith.constant 0 : i32
    return %arg0, %c0_i32 : i32, i32
  }
  func.func @transform_3(%arg0: i32) -> (i32, i32) {
    %c0_i32 = arith.constant 0 : i32
    %c0_i32_0 = arith.constant 0 : i32
    return %arg0, %c0_i32 : i32, i32
  }
}

</mosaic_0001>

<llo_original>
// kernel: tpu_custom_call.1
$region0: #{tpu_custom_call.1}
  #allocation0 [shape = 'u32[]', space=smem, size = 0x4, offset = 0x4, fixed_abs, tag = 'smem constant byte address 0x4 - core index']
  #allocation1 [shape = 'u32[144,128]{1,0:T(1,128)}', space=vmem, size = 0x12000, scoped, tag = 'internal scratch']
  %s0 = inlined_call_operand.vmem [shape: f32[8,256], index: 0, kind: input, shape index: {}]
  %s1 = inlined_call_operand.vmem [shape: f32[8,1], index: 1, kind: input, shape index: {}]
  %s2 = inlined_call_operand.vmem [shape: f32[8,1], index: 2, kind: input, shape index: {}]
  %s3 = inlined_call_operand.hbm [shape: f32[8,256], index: 3, kind: output, shape index: {}]
  %s4 = sld [smem:[#allocation0]]
  $region22: #{tpu_custom_call.1} parent=0
    _
  %s6 = ssub.s32 1, %s4
  %s7 = scalar_select 0, %s6, %s4
  $region1: #{tpu_custom_call.1} parent=0
    #allocation2 [shape = 'u8[8192]{0}', space=vmem, size = 0x2000, scoped, tag = 'output window, operand 0, single buffered']
    #allocation3 [shape = 's32[1]{0}', space=sflag, size = 0x4, scoped, tag = 'scoped memory for tpu_custom_call.1']
    %8 = vsyncpa [#allocation3], 0
    // Predicated region
    $region2: #{tpu_custom_call.1} parent=1 // pred_check
      _
    $region3: #{tpu_custom_call.1} parent=1 // pred_check_branch
      %10 = sbr.rel (0) target = $region5
    $region4: #{tpu_custom_call.1} parent=1 // pred_region
      _
    $region5: #{tpu_custom_call.1} parent=1 // pred_fallthru
      _
    // Predicated region
    $region6: #{tpu_custom_call.1} parent=1 // pred_check
      _
    $region7: #{tpu_custom_call.1} parent=1 // pred_check_branch
      %12 = sbr.rel (0) target = $region9
    $region8: #{tpu_custom_call.1} parent=1 // pred_region
      _
    $region9: #{tpu_custom_call.1} parent=1 // pred_fallthru
      _
    // Predicated region
    $region10: #{tpu_custom_call.1} parent=1 // pred_check
      _
    $region11: #{tpu_custom_call.1} parent=1 // pred_check_branch
      %14 = sbr.rel (0) target = $region13
    $region12: #{tpu_custom_call.1} parent=1 // pred_region
      _
    $region13: #{tpu_custom_call.1} parent=1 // pred_fallthru
      _
    %v15 = vld [vmem:[%s0] sm:$0xff]
    %v16 = vld [vmem:[%s0 + $0x8] sm:$0xff]
    %v17 = vadd.f32 %v15, %v16
    %18 = vadd.xlane.f32.xlu0 %v17
    %v19 = vpop.xlane.xlu0 %18
    %v20 = vmul.f32 %v15, %v15
    %v21 = vmul.f32 %v16, %v16
    %v22 = vadd.f32 %v20, %v21
    %23 = vadd.xlane.f32.xlu0 %v22
    %v24 = vpop.xlane.xlu0 %23
    %v25 = vmul.f32 %v19, 0.00390625
    %v26 = vmul.f32 %v24, 0.00390625
    %v27 = vmul.f32 %v25, %v25
    %v28 = vsub.f32 %v26, %v27
    %v29 = vmax.f32 %v28, 0.0
    %v30 = vadd.f32 %v29, 1e-05
    %v31 = vrsqrt.pop %v30
    %v32 = vld [vmem:[%s1] sm:$0xff]
    %v33 = vmul.f32 %v31, %v32
    %v34 = vld [vmem:[%s2] sm:$0xff]
    %v35 = vmul.f32 %v25, %v33
    %v36 = vsub.f32 %v34, %v35
    %38 = vset.pattern.permute.xlu0 0
    %39 = vperm.xlu0 %38, %v33
    %v40 = vpop.permute.xlu0 %39
    %v42 = vmul.f32 %v15, %v40
    %v43 = vmul.f32 %v16, %v40
    %45 = vset.pattern.permute.xlu0 0
    %46 = vperm.xlu0 %45, %v36
    %v47 = vpop.permute.xlu0 %46
    %v49 = vadd.f32 %v42, %v47
    %v50 = vadd.f32 %v43, %v47
    %51 = vst [vmem:[#allocation2] sm:$0xff] %v49
    %52 = vst [vmem:[#allocation2 + $0x8] sm:$0xff] %v50
    // Predicated region
    $region14: #{tpu_custom_call.1} parent=1 // pred_check
      _
    $region15: #{tpu_custom_call.1} parent=1 // pred_check_branch
      %54 = sbr.rel (0) target = $region17
    $region16: #{tpu_custom_call.1} parent=1 // pred_region
      %s56 = ssub.s32 256, 256
      %57 = vsyncadd [#allocation3], %s56
      %s59 = sshll.u32 [#allocation2], 4
      %s60 = int_to_ptr.vmem [resolvable:$true] %s59
      %62 = dma.vmem_to_hbm [thread:$0]  %s60, 256, %s3, [#allocation3]
    $region17: #{tpu_custom_call.1} parent=1 // pred_fallthru
      _
    // Predicated region
    $region18: #{tpu_custom_call.1} parent=1 // pred_check
      _
    $region19: #{tpu_custom_call.1} parent=1 // pred_check_branch
      %64 = sbr.rel (0) target = $region21
    $region20: #{tpu_custom_call.1} parent=1 // pred_region
      %65 = dma.done [#allocation3], 256
    $region21: #{tpu_custom_call.1} parent=1 // pred_fallthru
      _
    %66 = vsyncpa [#allocation3], 1

</llo_original>
